<compile_context>
chip_gen: v6e
topology: v6e:2x2x1
jax: 0.10.0
libtpu: 0.0.40
codegen_flags: <defaults>
</compile_context>

<pallas_src>
import functools

import jax
import jax.numpy as jnp
from jax.experimental import pallas as pl
from jax.experimental.pallas import tpu as pltpu


def _round_down_multiple(x, m):
    return (x // m) * m


def _device_kind():
    try:
        return jax.devices()[0].device_kind.lower()
    except Exception:
        return ""


def _vmem_capacity_bytes(kind):
    # Physical VMEM per TensorCore: v5e/v6e 128 MiB, v7x 64 MiB.
    try:
        return int(pltpu.get_tpu_info().vmem_capacity_bytes)
    except Exception:
        pass
    if "7" in kind:
        return 64 << 20
    return 128 << 20


# ---------------------------------------------------------------------------
# Single-pass fused kernel: pool + fc1 + relu + fc2 + sigmoid + scale
# (Bt batch elements per grid step, full feature map resident in VMEM)
# ---------------------------------------------------------------------------
def _se_fused_kernel(x_ref, w1_ref, w2_ref, o_ref, *, inv_hw, mul_in_f32):
    # x_ref / o_ref: (Bt, C, HW)   w1_ref: (Cr, C)   w2_ref: (C, Cr)
    x = x_ref[...]
    # Global average pool with f32 accumulation; no f32 copy of the tile.
    pooled = jnp.sum(x, axis=-1, dtype=jnp.float32) * inv_hw            # (Bt, C)
    w1 = w1_ref[...].astype(jnp.float32)                                # (Cr, C)
    w2 = w2_ref[...].astype(jnp.float32)                                # (C, Cr)
    # Excitation MLP; contraction on trailing dims keeps the PyTorch
    # nn.Linear (out, in) weight layout -> no transposes anywhere.
    h = jnp.einsum("bc,rc->br", pooled, w1,
                   preferred_element_type=jnp.float32)                  # (Bt, Cr)
    h = jnp.maximum(h, 0.0)
    s = jnp.einsum("br,cr->bc", h, w2,
                   preferred_element_type=jnp.float32)                  # (Bt, C)
    s = jax.nn.sigmoid(s)[:, :, None]                                   # (Bt, C, 1)
    if mul_in_f32:
        o_ref[...] = (x.astype(jnp.float32) * s).astype(o_ref.dtype)
    else:
        o_ref[...] = (x * s.astype(x.dtype)).astype(o_ref.dtype)


# ---------------------------------------------------------------------------
# Two-pass fallback (VMEM-constrained / very large maps / batch==1 on v7x)
# ---------------------------------------------------------------------------
def _se_pool_gate_kernel(x_ref, w1_ref, w2_ref, g_ref, *, inv_hw, hw, t_hw):
    # x_ref: (C, t_hw)   g_ref: (C, 1) f32  (raw-sum accumulator -> final gate)
    k = pl.program_id(1)

    @pl.when(k == 0)
    def _():
        g_ref[...] = jnp.zeros_like(g_ref)

    x = x_ref[...]
    if hw % t_hw != 0:
        # Final (partial) tile: mask lanes past the true spatial size so the
        # boundary-block padding never pollutes the sum.
        col = jax.lax.broadcasted_iota(jnp.int32, x.shape, 1) + k * t_hw
        x = jnp.where(col < hw, x, jnp.zeros_like(x))
    # Accumulate raw sums; inv_hw is applied once in the tail.
    g_ref[...] += jnp.sum(x, axis=-1, keepdims=True, dtype=jnp.float32)

    @pl.when(k == pl.num_programs(1) - 1)
    def _():
        # Tiny excitation MLP fused into the last HW tile (column orientation,
        # no transposes); hides under the final tile's DMA.
        pooled = g_ref[...] * inv_hw                                     # (C, 1)
        h = jnp.dot(w1_ref[...].astype(jnp.float32), pooled,
                    preferred_element_type=jnp.float32)                  # (Cr, 1)
        h = jnp.maximum(h, 0.0)
        s = jnp.dot(w2_ref[...].astype(jnp.float32), h,
                    preferred_element_type=jnp.float32)                  # (C, 1)
        g_ref[...] = jax.nn.sigmoid(s)


def _se_scale_kernel(x_ref, g_ref, o_ref, *, mul_in_f32):
    # x_ref: (C, t_hw)   g_ref: (C, 1) f32   o_ref: (C, t_hw)
    x = x_ref[...]
    g = g_ref[...]
    if mul_in_f32:
        o_ref[...] = (x.astype(jnp.float32) * g).astype(o_ref.dtype)
    else:
        o_ref[...] = (x * g.astype(x.dtype)).astype(o_ref.dtype)


# ---------------------------------------------------------------------------
# Wrapper
# ---------------------------------------------------------------------------
def se_block(x_nchw, w_fc1, w_fc2, *,
             single_pass_budget_bytes=None,
             force_two_pass=False,
             tile_hw=None):
    """Squeeze-and-Excitation forward.

    x_nchw : (B, C, H, W)
    w_fc1  : (C // r, C)  -- nn.Linear(C, C//r, bias=False).weight
    w_fc2  : (C, C // r)  -- nn.Linear(C//r, C, bias=False).weight
    """
    B, C, H, W = x_nchw.shape
    Cr = w_fc1.shape[0]
    assert w_fc1.shape == (Cr, C) and w_fc2.shape == (C, Cr)

    HW = H * W
    inv_hw = 1.0 / float(HW)
    itemsize = jnp.dtype(x_nchw.dtype).itemsize

    kind = _device_kind()
    vmem_cap = _vmem_capacity_bytes(kind)
    is_v5 = "v5" in kind
    # bf16 multiply is native on the v6e/v7x VPU; on v5e it lowers to convert
    # + f32 anyway, so keep the gating multiply in f32 there (store narrows).
    mul_in_f32 = (x_nchw.dtype == jnp.float32) or is_v5

    if single_pass_budget_bytes is None:
        # Generation-aware: stay on the 1R+1W single-pass path as long as
        # possible on 128-MiB parts (v5e/v6e); conservative on v7x (64 MiB).
        single_pass_budget_bytes = (100 << 20) if vmem_cap >= (100 << 20) else (40 << 20)

    w_bytes = (w_fc1.size * jnp.dtype(w_fc1.dtype).itemsize
               + w_fc2.size * jnp.dtype(w_fc2.dtype).itemsize)
    per_elem_bytes = C * HW * itemsize

    def _need(bt):
        # 2x in + 2x out double-buffered blocks + weights (x2) + temp slack.
        return 5 * bt * per_elem_bytes + 2 * w_bytes + (1 << 20)

    # --- pick the batch tile Bt for the fused single-pass path ---
    bt = 0
    if not force_two_pass:
        bt_cap = min(B, 8)
        if vmem_cap < (100 << 20) and B >= 2:
            # v7x has 2 TensorCores: keep at least 2 parallel grid steps.
            bt_cap = min(bt_cap, max(1, B // 2))
        for cand in range(bt_cap, 0, -1):
            if B % cand == 0 and _need(cand) <= single_pass_budget_bytes:
                bt = cand
                break
        # v7x-class part with batch==1: one fused step would idle the second
        # TensorCore -> prefer the fully-parallel two-pass split for big maps.
        if bt == 1 and B == 1 and vmem_cap < (100 << 20) and HW >= 8 * 128:
            bt = 0

    x_flat = x_nchw.reshape(B, C, HW)   # free view of contiguous NCHW, no copy

    if bt > 0:
        need = _need(bt)
        vmem_limit = int(min(max(need + (8 << 20), 32 << 20),
                             vmem_cap - (16 << 20)))
        out_flat = pl.pallas_call(
            functools.partial(_se_fused_kernel, inv_hw=inv_hw,
                              mul_in_f32=mul_in_f32),
            out_shape=jax.ShapeDtypeStruct((B, C, HW), x_nchw.dtype),
            grid_spec=pltpu.PrefetchScalarGridSpec(
                num_scalar_prefetch=0,
                grid=(B // bt,),
                in_specs=[
                    # Full-dim (C, HW) block: no padding, masked stores if
                    # HW % 128 != 0 (cheaper than pad+slice HBM copies).
                    pl.BlockSpec((bt, C, HW), lambda b: (b, 0, 0)),
                    # Constant index_maps: weights fetched once, re-used.
                    pl.BlockSpec((Cr, C), lambda b: (0, 0)),
                    pl.BlockSpec((C, Cr), lambda b: (0, 0)),
                ],
                out_specs=pl.BlockSpec((bt, C, HW), lambda b: (b, 0, 0)),
            ),
            compiler_params=pltpu.CompilerParams(
                dimension_semantics=("parallel",),
                vmem_limit_bytes=vmem_limit),
        )(x_flat, w_fc1, w_fc2)
        return out_flat.reshape(B, C, H, W)

    # ----------------- two-pass fallback -----------------
    # Lane-dense HW tiles (multiples of 128) sized from the physical VMEM; no
    # wrapper padding at all -- the final partial tile is masked in-kernel in
    # pass A and store-masked by Pallas in pass B.
    tile_budget = min(vmem_cap // 3, 64 << 20)
    if tile_hw is not None:
        t_hw = max(128, _round_down_multiple(int(tile_hw), 128))
    else:
        t_hw = max(128, _round_down_multiple(tile_budget // (4 * C * itemsize), 128))
    if t_hw >= HW:
        t_hw = HW
        n_hw = 1
    else:
        n_hw = -(-HW // t_hw)

    two_pass_need = 4 * C * t_hw * itemsize + 2 * w_bytes + (1 << 20)
    two_pass_limit = int(min(max(two_pass_need + (8 << 20), 32 << 20),
                             vmem_cap - (16 << 20)))

    # Pass A: stream x once, accumulate raw per-channel sums; the excitation
    # MLP + sigmoid are fused into the final HW tile, emitting the gates
    # directly (no pooled HBM round trip, no extra XLA dispatch).
    gates = pl.pallas_call(
        functools.partial(_se_pool_gate_kernel, inv_hw=inv_hw, hw=HW, t_hw=t_hw),
        out_shape=jax.ShapeDtypeStruct((B, C, 1), jnp.float32),
        grid_spec=pltpu.PrefetchScalarGridSpec(
            num_scalar_prefetch=0,
            grid=(B, n_hw),
            in_specs=[
                pl.BlockSpec((pl.Squeezed(), C, t_hw), lambda b, k: (b, 0, k)),
                pl.BlockSpec((Cr, C), lambda b, k: (0, 0)),
                pl.BlockSpec((C, Cr), lambda b, k: (0, 0)),
            ],
            out_specs=pl.BlockSpec((pl.Squeezed(), C, 1), lambda b, k: (b, 0, 0)),
        ),
        compiler_params=pltpu.CompilerParams(
            dimension_semantics=("parallel", "arbitrary"),
            vmem_limit_bytes=two_pass_limit),
    )(x_flat, w_fc1, w_fc2)

    # Pass B: apply the per-channel gate; fully parallel grid (feeds both v7x
    # TensorCores even at B == 1).
    out_flat = pl.pallas_call(
        functools.partial(_se_scale_kernel, mul_in_f32=mul_in_f32),
        out_shape=jax.ShapeDtypeStruct((B, C, HW), x_nchw.dtype),
        grid_spec=pltpu.PrefetchScalarGridSpec(
            num_scalar_prefetch=0,
            grid=(B, n_hw),
            in_specs=[
                pl.BlockSpec((pl.Squeezed(), C, t_hw), lambda b, j: (b, 0, j)),
                pl.BlockSpec((pl.Squeezed(), C, 1), lambda b, j: (b, 0, 0)),
            ],
            out_specs=pl.BlockSpec((pl.Squeezed(), C, t_hw), lambda b, j: (b, 0, j)),
        ),
        compiler_params=pltpu.CompilerParams(
            dimension_semantics=("parallel", "parallel"),
            vmem_limit_bytes=two_pass_limit),
    )(x_flat, gates)

    return out_flat.reshape(B, C, H, W)


def se_block_ref(x_nchw, w_fc1, w_fc2):
    # Pure-JAX reference matching PyTorch SEBlock.forward
    # (weights in nn.Linear (out, in) layout).
    pooled = jnp.mean(x_nchw, axis=(2, 3))                    # (B, C)
    y = jnp.maximum(pooled @ w_fc1.T, 0.0)                    # (B, C//r)
    y = jax.nn.sigmoid(y @ w_fc2.T)                           # (B, C)
    return x_nchw * y[:, :, None, None]


if __name__ == "__main__":
    # Shapes implied by the module: NCHW input, in_channels divisible by
    # reduction_ratio=16 so the hidden dim is nonzero.
    B, C, H, W = 2, 64, 16, 16
    reduction_ratio = 16
    Cr = C // reduction_ratio

    key = jax.random.PRNGKey(0)
    kx, k1, k2, kx2 = jax.random.split(key, 4)

    x = jax.random.normal(kx, (B, C, H, W), dtype=jnp.float32)
    # PyTorch nn.Linear(in, out, bias=False).weight has shape (out, in).
    w_fc1 = jax.random.normal(k1, (Cr, C), dtype=jnp.float32) * 0.1
    w_fc2 = jax.random.normal(k2, (C, Cr), dtype=jnp.float32) * 0.1

    # Default path: fused single-pass, multiple batch elements per grid step.
    ref = se_block_ref(x, w_fc1, w_fc2)
    out = jax.block_until_ready(se_block(x, w_fc1, w_fc2))
    assert out.shape == (B, C, H, W)
    assert jnp.allclose(out, ref, atol=1e-5, rtol=1e-5)

    # Non-128-multiple spatial size (13x13 -> HW=169): exercises the
    # full-dim / masked-store single-pass path with zero wrapper pad/slice.
    x_odd = jax.random.normal(kx2, (B, C, 13, 13), dtype=jnp.float32)
    ref_odd = se_block_ref(x_odd, w_fc1, w_fc2)
    out_odd = jax.block_until_ready(se_block(x_odd, w_fc1, w_fc2))
    assert jnp.allclose(out_odd, ref_odd, atol=1e-5, rtol=1e-5)

    # Two-pass fallback with a partial final HW tile: in-kernel mask in the
    # pool/gate pass, masked store in the scale pass, fused excitation MLP.
    out_odd2 = jax.block_until_ready(
        se_block(x_odd, w_fc1, w_fc2, force_two_pass=True, tile_hw=128))
    assert jnp.allclose(out_odd2, ref_odd, atol=1e-5, rtol=1e-5)

    print("KERNEL_OK")
</pallas_src>

<mosaic_0001>
module attributes {stable_mosaic.version = 11 : i64} {
  func.func @_se_fused_kernel(%arg0: i32, %arg1: memref<2x64x256xf32, #tpu.memory_space<vmem>>, %arg2: memref<4x64xf32, #tpu.memory_space<vmem>>, %arg3: memref<64x4xf32, #tpu.memory_space<vmem>>, %arg4: memref<2x64x256xf32, #tpu.memory_space<vmem>>) attributes {dimension_semantics = [#tpu.dimension_semantics<parallel>], iteration_bounds = array<i64: 1>, scalar_prefetch = 0 : i64, scratch_operands = 0 : i64, tpu.core_type = #tpu.core_type<tc>, window_params = [{transform_indices = @transform_0, window_bounds = array<i64: 2, 64, 256>}, {pipeline_mode = #tpu.pipeline_mode<synchronous>, transform_indices = @transform_1, window_bounds = array<i64: 4, 64>}, {pipeline_mode = #tpu.pipeline_mode<synchronous>, transform_indices = @transform_2, window_bounds = array<i64: 64, 4>}, {transform_indices = @transform_3, window_bounds = array<i64: 2, 64, 256>}]} {
    %c0 = arith.constant 0 : index
    %c0_0 = arith.constant 0 : index
    %c0_1 = arith.constant 0 : index
    %0 = vector.load %arg1[%c0, %c0_0, %c0_1] : memref<2x64x256xf32, #tpu.memory_space<vmem>>, vector<2x64x256xf32>
    %cst = arith.constant dense<0.000000e+00> : vector<2x64xf32>
    %1 = vector.multi_reduction <add>, %0, %cst [2] : vector<2x64x256xf32> to vector<2x64xf32>
    %cst_2 = arith.constant 3.906250e-03 : f32
    %2 = vector.broadcast %cst_2 : f32 to vector<2x64xf32>
    %3 = arith.mulf %1, %2 : vector<2x64xf32>
    %c0_3 = arith.constant 0 : index
    %c0_4 = arith.constant 0 : index
    %4 = vector.load %arg2[%c0_3, %c0_4] : memref<4x64xf32, #tpu.memory_space<vmem>>, vector<4x64xf32>
    %c0_5 = arith.constant 0 : index
    %c0_6 = arith.constant 0 : index
    %5 = vector.load %arg3[%c0_5, %c0_6] : memref<64x4xf32, #tpu.memory_space<vmem>>, vector<64x4xf32>
    "tpu.trace_start"() <{level = 10 : i32, message = "bc,rc->br"}> : () -> ()
    %cst_7 = arith.constant dense<0.000000e+00> : vector<2x4xf32>
    %6 = tpu.matmul %3, %4, %cst_7 {dimension_numbers = #tpu.dot_dimension_numbers<[1], [1], [0], [0], [0, 0, 1, 0], [], []>} : vector<2x64xf32>, vector<4x64xf32>, vector<2x4xf32> -> vector<2x4xf32>
    "tpu.trace_stop"() : () -> ()
    %cst_8 = arith.constant 0.000000e+00 : f32
    %7 = vector.broadcast %cst_8 : f32 to vector<2x4xf32>
    %8 = arith.maximumf %6, %7 : vector<2x4xf32>
    "tpu.trace_start"() <{level = 10 : i32, message = "br,cr->bc"}> : () -> ()
    %cst_9 = arith.constant dense<0.000000e+00> : vector<2x64xf32>
    %9 = tpu.matmul %8, %5, %cst_9 {dimension_numbers = #tpu.dot_dimension_numbers<[1], [1], [0], [0], [0, 0, 1, 0], [], []>} : vector<2x4xf32>, vector<64x4xf32>, vector<2x64xf32> -> vector<2x64xf32>
    "tpu.trace_stop"() : () -> ()
    %10 = arith.negf %9 : vector<2x64xf32>
    %11 = math.exp %10 : vector<2x64xf32>
    %cst_10 = arith.constant 1.000000e+00 : f32
    %12 = vector.broadcast %cst_10 : f32 to vector<2x64xf32>
    %13 = arith.addf %12, %11 : vector<2x64xf32>
    %14 = arith.divf %12, %13 : vector<2x64xf32>
    %15 = vector.shape_cast %14 : vector<2x64xf32> to vector<2x64x1xf32>
    %16 = vector.broadcast %15 : vector<2x64x1xf32> to vector<2x64x256xf32>
    %17 = arith.mulf %0, %16 : vector<2x64x256xf32>
    %c0_11 = arith.constant 0 : index
    %c0_12 = arith.constant 0 : index
    %c0_13 = arith.constant 0 : index
    %18 = vector.load %arg4[%c0_11, %c0_12, %c0_13] : memref<2x64x256xf32, #tpu.memory_space<vmem>>, vector<2x64x256xf32>
    tpu.vector_store %arg4[%c0_11, %c0_12, %c0_13], %17 {strides = array<i32>} : memref<2x64x256xf32, #tpu.memory_space<vmem>>, vector<2x64x256xf32>,
    return
  }
  func.func @transform_0(%arg0: i32) -> (i32, i32, i32) {
    %c0_i32 = arith.constant 0 : i32
    %c0_i32_0 = arith.constant 0 : i32
    %c0_i32_1 = arith.constant 0 : i32
    return %arg0, %c0_i32, %c0_i32_0 : i32, i32, i32
  }
  func.func @transform_1(%arg0: i32) -> (i32, i32) {
    %c0_i32 = arith.constant 0 : i32
    %c0_i32_0 = arith.constant 0 : i32
    %c0_i32_1 = arith.constant 0 : i32
    return %c0_i32, %c0_i32_0 : i32, i32
  }
  func.func @transform_2(%arg0: i32) -> (i32, i32) {
    %c0_i32 = arith.constant 0 : i32
    %c0_i32_0 = arith.constant 0 : i32
    %c0_i32_1 = arith.constant 0 : i32
    return %c0_i32, %c0_i32_0 : i32, i32
  }
  func.func @transform_3(%arg0: i32) -> (i32, i32, i32) {
    %c0_i32 = arith.constant 0 : i32
    %c0_i32_0 = arith.constant 0 : i32
    %c0_i32_1 = arith.constant 0 : i32
    return %arg0, %c0_i32, %c0_i32_0 : i32, i32, i32
  }
}

</mosaic_0001>

<llo_original>
// kernel: tpu_custom_call.1
$region0: #{tpu_custom_call.1}
  #allocation0 [shape = 'u32[]', space=smem, size = 0x4, offset = 0x4, fixed_abs, tag = 'smem constant byte address 0x4 - core index']
  #allocation1 [shape = 'u32[144,128]{1,0:T(1,128)}', space=vmem, size = 0x12000, scoped, tag = 'internal scratch']
  %s0 = inlined_call_operand.hbm [shape: f32[2,64,256], index: 0, kind: input, shape index: {}]
  %s1 = inlined_call_operand.vmem [shape: f32[4,64], index: 1, kind: input, shape index: {}]
  %s2 = inlined_call_operand.vmem [shape: f32[64,4], index: 2, kind: input, shape index: {}]
  %s3 = inlined_call_operand.hbm [shape: f32[2,64,256], index: 3, kind: output, shape index: {}]
  %s4 = sld [smem:[#allocation0]]
  $region26: #{tpu_custom_call.1} parent=0
    _
  %s6 = ssub.s32 1, %s4
  %s7 = scalar_select 0, %s6, %s4
  $region1: #{tpu_custom_call.1} parent=0
    #allocation2 [shape = 'u8[131072]{0}', space=vmem, size = 0x20000, scoped, tag = 'input window, operand 0, single buffered']
    #allocation3 [shape = 's32[1]{0}', space=sflag, size = 0x4, scoped, tag = 'scoped memory for tpu_custom_call.1']
    #allocation4 [shape = 's32[1]{0}', space=sflag, size = 0x4, scoped, tag = 'scoped memory for tpu_custom_call.1']
    #allocation5 [shape = 'u8[131072]{0}', space=vmem, size = 0x20000, scoped, tag = 'output window, operand 0, single buffered']
    %8 = vsyncpa [#allocation3], 0
    %9 = vsyncpa [#allocation4], 0
    // Predicated region
    $region2: #{tpu_custom_call.1} parent=1 // pred_check
      _
    $region3: #{tpu_custom_call.1} parent=1 // pred_check_branch
      %11 = sbr.rel (0) target = $region5
    $region4: #{tpu_custom_call.1} parent=1 // pred_region
      %s13 = ssub.s32 4096, 4096
      %14 = vsyncadd [#allocation3], %s13
      %s15 = sshll.u32 [#allocation2], 4
      %s16 = int_to_ptr.vmem [resolvable:$true] %s15
      %21 = dma.hbm_to_vmem [thread:$0]  %s0, 4096, %s16, [#allocation3], 256, 256, 16
    $region5: #{tpu_custom_call.1} parent=1 // pred_fallthru
      _
    // Predicated region
    $region6: #{tpu_custom_call.1} parent=1 // pred_check
      _
    $region7: #{tpu_custom_call.1} parent=1 // pred_check_branch
      %23 = sbr.rel (0) target = $region9
    $region8: #{tpu_custom_call.1} parent=1 // pred_region
      _
    $region9: #{tpu_custom_call.1} parent=1 // pred_fallthru
      _
    // Predicated region
    $region10: #{tpu_custom_call.1} parent=1 // pred_check
      _
    $region11: #{tpu_custom_call.1} parent=1 // pred_check_branch
      %25 = sbr.rel (0) target = $region13
    $region12: #{tpu_custom_call.1} parent=1 // pred_region
      _
    $region13: #{tpu_custom_call.1} parent=1 // pred_fallthru
      _
    // Predicated region
    $region14: #{tpu_custom_call.1} parent=1 // pred_check
      _
    $region15: #{tpu_custom_call.1} parent=1 // pred_check_branch
      %27 = sbr.rel (0) target = $region17
    $region16: #{tpu_custom_call.1} parent=1 // pred_region
      %28 = dma.done [#allocation3], 4096
    $region17: #{tpu_custom_call.1} parent=1 // pred_fallthru
      _
    %v29 = vld [vmem:[#allocation2] sm:$0xff]
    %v30 = vld [vmem:[#allocation2 + $0x8] sm:$0xff]
    %v31 = vld [vmem:[#allocation2 + $0x10] sm:$0xff]
    %v32 = vld [vmem:[#allocation2 + $0x18] sm:$0xff]
    %v33 = vld [vmem:[#allocation2 + $0x20] sm:$0xff]
    %v34 = vld [vmem:[#allocation2 + $0x28] sm:$0xff]
    %v35 = vld [vmem:[#allocation2 + $0x30] sm:$0xff]
    %v36 = vld [vmem:[#allocation2 + $0x38] sm:$0xff]
    %v37 = vld [vmem:[#allocation2 + $0x40] sm:$0xff]
    %v38 = vld [vmem:[#allocation2 + $0x48] sm:$0xff]
    %v39 = vld [vmem:[#allocation2 + $0x50] sm:$0xff]
    %v40 = vld [vmem:[#allocation2 + $0x58] sm:$0xff]
    %v41 = vld [vmem:[#allocation2 + $0x60] sm:$0xff]
    %v42 = vld [vmem:[#allocation2 + $0x68] sm:$0xff]
    %v43 = vld [vmem:[#allocation2 + $0x70] sm:$0xff]
    %v44 = vld [vmem:[#allocation2 + $0x78] sm:$0xff]
    %v45 = vld [vmem:[#allocation2 + $0x80] sm:$0xff]
    %v46 = vld [vmem:[#allocation2 + $0x88] sm:$0xff]
    %v47 = vld [vmem:[#allocation2 + $0x90] sm:$0xff]
    %v48 = vld [vmem:[#allocation2 + $0x98] sm:$0xff]
    %v49 = vld [vmem:[#allocation2 + $0xa0] sm:$0xff]
    %v50 = vld [vmem:[#allocation2 + $0xa8] sm:$0xff]
    %v51 = vld [vmem:[#allocation2 + $0xb0] sm:$0xff]
    %v52 = vld [vmem:[#allocation2 + $0xb8] sm:$0xff]
    %v53 = vld [vmem:[#allocation2 + $0xc0] sm:$0xff]
    %v54 = vld [vmem:[#allocation2 + $0xc8] sm:$0xff]
    %v55 = vld [vmem:[#allocation2 + $0xd0] sm:$0xff]
    %v56 = vld [vmem:[#allocation2 + $0xd8] sm:$0xff]
    %v57 = vld [vmem:[#allocation2 + $0xe0] sm:$0xff]
    %v58 = vld [vmem:[#allocation2 + $0xe8] sm:$0xff]
    %v59 = vld [vmem:[#allocation2 + $0xf0] sm:$0xff]
    %v60 = vld [vmem:[#allocation2 + $0xf8] sm:$0xff]
    %v61 = vadd.f32 %v29, %v30
    %62 = vadd.xlane.f32.xlu0 %v61
    %v63 = vpop.xlane.xlu0 %62
    %v64 = vadd.f32 %v31, %v32
    %65 = vadd.xlane.f32.xlu0 %v64
    %v66 = vpop.xlane.xlu0 %65
    %v67 = vadd.f32 %v33, %v34
    %68 = vadd.xlane.f32.xlu0 %v67
    %v69 = vpop.xlane.xlu0 %68
    %v70 = vadd.f32 %v35, %v36
    %71 = vadd.xlane.f32.xlu0 %v70
    %v72 = vpop.xlane.xlu0 %71
    %v73 = vadd.f32 %v37, %v38
    %74 = vadd.xlane.f32.xlu0 %v73
    %v75 = vpop.xlane.xlu0 %74
    %v76 = vadd.f32 %v39, %v40
    %77 = vadd.xlane.f32.xlu0 %v76
    %v78 = vpop.xlane.xlu0 %77
    %v79 = vadd.f32 %v41, %v42
    %80 = vadd.xlane.f32.xlu0 %v79
    %v81 = vpop.xlane.xlu0 %80
    %v82 = vadd.f32 %v43, %v44
    %83 = vadd.xlane.f32.xlu0 %v82
    %v84 = vpop.xlane.xlu0 %83
    %v85 = vadd.f32 %v45, %v46
    %86 = vadd.xlane.f32.xlu0 %v85
    %v87 = vpop.xlane.xlu0 %86
    %v88 = vadd.f32 %v47, %v48
    %89 = vadd.xlane.f32.xlu0 %v88
    %v90 = vpop.xlane.xlu0 %89
    %v91 = vadd.f32 %v49, %v50
    %92 = vadd.xlane.f32.xlu0 %v91
    %v93 = vpop.xlane.xlu0 %92
    %v94 = vadd.f32 %v51, %v52
    %95 = vadd.xlane.f32.xlu0 %v94
    %v96 = vpop.xlane.xlu0 %95
    %v97 = vadd.f32 %v53, %v54
    %98 = vadd.xlane.f32.xlu0 %v97
    %v99 = vpop.xlane.xlu0 %98
    %v100 = vadd.f32 %v55, %v56
    %101 = vadd.xlane.f32.xlu0 %v100
    %v102 = vpop.xlane.xlu0 %101
    %v103 = vadd.f32 %v57, %v58
    %104 = vadd.xlane.f32.xlu0 %v103
    %v105 = vpop.xlane.xlu0 %104
    %v106 = vadd.f32 %v59, %v60
    %107 = vadd.xlane.f32.xlu0 %v106
    %v108 = vpop.xlane.xlu0 %107
    %v109 = vmul.f32 %v63, 0.00390625
    %v110 = vmul.f32 %v66, 0.00390625
    %v111 = vmul.f32 %v69, 0.00390625
    %v112 = vmul.f32 %v72, 0.00390625
    %v113 = vmul.f32 %v75, 0.00390625
    %v114 = vmul.f32 %v78, 0.00390625
    %v115 = vmul.f32 %v81, 0.00390625
    %v116 = vmul.f32 %v84, 0.00390625
    %v117 = vmul.f32 %v87, 0.00390625
    %v118 = vmul.f32 %v90, 0.00390625
    %v119 = vmul.f32 %v93, 0.00390625
    %v120 = vmul.f32 %v96, 0.00390625
    %v121 = vmul.f32 %v99, 0.00390625
    %v122 = vmul.f32 %v102, 0.00390625
    %v123 = vmul.f32 %v105, 0.00390625
    %v124 = vmul.f32 %v108, 0.00390625
    %v125 = vld [vmem:[%s1] sm:$0xf]
    %v126 = vld [vmem:[%s2] sm:$0xff]
    %v127 = vld [vmem:[%s2 + $0x8] sm:$0xff]
    %v128 = vld [vmem:[%s2 + $0x10] sm:$0xff]
    %v129 = vld [vmem:[%s2 + $0x18] sm:$0xff]
    %v130 = vld [vmem:[%s2 + $0x20] sm:$0xff]
    %v131 = vld [vmem:[%s2 + $0x28] sm:$0xff]
    %v132 = vld [vmem:[%s2 + $0x30] sm:$0xff]
    %v133 = vld [vmem:[%s2 + $0x38] sm:$0xff]
    %v150 = vlaneseq
    %v151 = vand.u32 %v150, 127
    %v152 = vlaneseq
    %v153 = vshrl.u32 %v152, 7
    %v154 = vsub.s32 %v151, %v153
    %v155 = vrot.slane %v109, %v154
    %v156 = vadd.s32 %v151, 4294967288
    %v157 = vlaneseq
    %v158 = vshrl.u32 %v157, 7
    %v159 = vsub.s32 %v156, %v158
    %v160 = vrot.slane %v110, %v159
    %vm161 = vcmask 130112
    %v162 = vsel %vm161, %v160, %v155
    %v163 = vadd.s32 %v151, 4294967280
    %v164 = vlaneseq
    %v165 = vshrl.u32 %v164, 7
    %v166 = vsub.s32 %v163, %v165
    %v167 = vrot.slane %v111, %v166
    %vm168 = vcmask 195712
    %v169 = vsel %vm168, %v167, %v162
    %v170 = vadd.s32 %v151, 4294967272
    %v171 = vlaneseq
    %v172 = vshrl.u32 %v171, 7
    %v173 = vsub.s32 %v170, %v172
    %v174 = vrot.slane %v112, %v173
    %vm175 = vcmask 261312
    %v176 = vsel %vm175, %v174, %v169
    %v177 = vadd.s32 %v151, 4294967264
    %v178 = vlaneseq
    %v179 = vshrl.u32 %v178, 7
    %v180 = vsub.s32 %v177, %v179
    %v181 = vrot.slane %v113, %v180
    %vm182 = vcmask 326912
    %v183 = vsel %vm182, %v181, %v176
    %v184 = vadd.s32 %v151, 4294967256
    %v185 = vlaneseq
    %v186 = vshrl.u32 %v185, 7
    %v187 = vsub.s32 %v184, %v186
    %v188 = vrot.slane %v114, %v187
    %vm189 = vcmask 392512
    %v190 = vsel %vm189, %v188, %v183
    %v191 = vadd.s32 %v151, 4294967248
    %v192 = vlaneseq
    %v193 = vshrl.u32 %v192, 7
    %v194 = vsub.s32 %v191, %v193
    %v195 = vrot.slane %v115, %v194
    %vm196 = vcmask 458112
    %v197 = vsel %vm196, %v195, %v190
    %v198 = vadd.s32 %v151, 4294967240
    %v199 = vlaneseq
    %v200 = vshrl.u32 %v199, 7
    %v201 = vsub.s32 %v198, %v200
    %v202 = vrot.slane %v116, %v201
    %vm203 = vcmask 523712
    %v204 = vsel %vm203, %v202, %v197
    %v205 = vlaneseq
    %v206 = vshrl.u32 %v205, 7
    %v207 = vsub.s32 %v151, %v206
    %v208 = vrot.slane %v117, %v207
    %v209 = vlaneseq
    %v210 = vshrl.u32 %v209, 7
    %v211 = vsub.s32 %v156, %v210
    %v212 = vrot.slane %v118, %v211
    %v213 = vsel %vm161, %v212, %v208
    %v214 = vlaneseq
    %v215 = vshrl.u32 %v214, 7
    %v216 = vsub.s32 %v163, %v215
    %v217 = vrot.slane %v119, %v216
    %v218 = vsel %vm168, %v217, %v213
    %v219 = vlaneseq
    %v220 = vshrl.u32 %v219, 7
    %v221 = vsub.s32 %v170, %v220
    %v222 = vrot.slane %v120, %v221
    %v223 = vsel %vm175, %v222, %v218
    %v224 = vlaneseq
    %v225 = vshrl.u32 %v224, 7
    %v226 = vsub.s32 %v177, %v225
    %v227 = vrot.slane %v121, %v226
    %v228 = vsel %vm182, %v227, %v223
    %v229 = vlaneseq
    %v230 = vshrl.u32 %v229, 7
    %v231 = vsub.s32 %v184, %v230
    %v232 = vrot.slane %v122, %v231
    %v233 = vsel %vm189, %v232, %v228
    %v234 = vlaneseq
    %v235 = vshrl.u32 %v234, 7
    %v236 = vsub.s32 %v191, %v235
    %v237 = vrot.slane %v123, %v236
    %v238 = vsel %vm196, %v237, %v233
    %v239 = vlaneseq
    %v240 = vshrl.u32 %v239, 7
    %v241 = vsub.s32 %v198, %v240
    %v242 = vrot.slane %v124, %v241
    %v243 = vsel %vm203, %v242, %v238
    %vm244 = vcmask 1041409
    %v245 = vsel %vm244, %v243, %v204
    %vm246 = vcmask 523264
    %v247 = vsel %vm246, %v245, 0
    %v250 = vsel %vm246, %v125, 0
    %252 = vmatprep.subr.mxu0 0.0
    %253 = vmatpush1.xpose.msra.mxu0 0.0
    %254 = vmatprep.subr.mxu0 0.0
    %255 = vmatpush1.xpose.msra.mxu0 0.0
    %256 = vmatprep.subr.mxu0 0.0
    %257 = vmatpush1.xpose.msra.mxu0 0.0
    %258 = vmatprep.subr.mxu0 0.0
    %259 = vmatpush1.xpose.msra.mxu0 0.0
    %260 = vmatprep.subr.mxu0 0.0
    %261 = vmatpush1.xpose.msra.mxu0 0.0
    %262 = vmatprep.subr.mxu0 0.0
    %263 = vmatpush1.xpose.msra.mxu0 0.0
    %264 = vmatprep.subr.mxu0 0.0
    %265 = vmatpush1.xpose.msra.mxu0 0.0
    %266 = vmatprep.subr.mxu0 0.0
    %267 = vmatpush1.xpose.msra.mxu0 0.0
    %268 = vmatprep.subr.mxu0 0.0
    %269 = vmatpush1.xpose.msra.mxu0 0.0
    %270 = vmatprep.subr.mxu0 0.0
    %271 = vmatpush1.xpose.msra.mxu0 0.0
    %272 = vmatprep.subr.mxu0 0.0
    %273 = vmatpush1.xpose.msra.mxu0 0.0
    %274 = vmatprep.subr.mxu0 0.0
    %275 = vmatpush1.xpose.msra.mxu0 0.0
    %276 = vmatprep.subr.mxu0 0.0
    %277 = vmatpush1.xpose.msra.mxu0 0.0
    %278 = vmatprep.subr.mxu0 0.0
    %279 = vmatpush1.xpose.msra.mxu0 0.0
    %280 = vmatprep.subr.mxu0 0.0
    %281 = vmatpush1.xpose.msra.mxu0 0.0
    %282 = vmatprep.subr.mxu0 0.0
    %283 = vmatpush1.xpose.msra.mxu0 %v250
    %284 = vmatprep.subr.mxu0 0.0
    %285 = vmatpush2.xpose.msra.mxu0 0.0
    %286 = vmatprep.subr.mxu0 0.0
    %287 = vmatpush2.xpose.msra.mxu0 0.0
    %288 = vmatprep.subr.mxu0 0.0
    %289 = vmatpush2.xpose.msra.mxu0 0.0
    %290 = vmatprep.subr.mxu0 0.0
    %291 = vmatpush2.xpose.msra.mxu0 0.0
    %292 = vmatprep.subr.mxu0 0.0
    %293 = vmatpush2.xpose.msra.mxu0 0.0
    %294 = vmatprep.subr.mxu0 0.0
    %295 = vmatpush2.xpose.msra.mxu0 0.0
    %296 = vmatprep.subr.mxu0 0.0
    %297 = vmatpush2.xpose.msra.mxu0 0.0
    %298 = vmatprep.subr.mxu0 0.0
    %299 = vmatpush2.xpose.msra.mxu0 0.0
    %300 = vmatprep.subr.mxu0 0.0
    %301 = vmatpush2.xpose.msra.mxu0 0.0
    %302 = vmatprep.subr.mxu0 0.0
    %303 = vmatpush2.xpose.msra.mxu0 0.0
    %304 = vmatprep.subr.mxu0 0.0
    %305 = vmatpush2.xpose.msra.mxu0 0.0
    %306 = vmatprep.subr.mxu0 0.0
    %307 = vmatpush2.xpose.msra.mxu0 0.0
    %308 = vmatprep.subr.mxu0 0.0
    %309 = vmatpush2.xpose.msra.mxu0 0.0
    %310 = vmatprep.subr.mxu0 0.0
    %311 = vmatpush2.xpose.msra.mxu0 0.0
    %312 = vmatprep.subr.mxu0 0.0
    %313 = vmatpush2.xpose.msra.mxu0 0.0
    %314 = vmatprep.subr.mxu0 0.0
    %315 = vmatpush2.xpose.msra.mxu0 0.0
    %316 = vmatprep.mubr.f32.mxu0 0.0
    %317 = vmatmul.mubr.f32.gmra.mxu0 %v247
    %v318 = vpop.f32.mrf.mxu0
    %v319 = vadd.f32 0.0, %v318
    %v320 = vpop.f32.mrf.mxu0
    %321 = vdwg.mxu0
    %v322 = vmax.f32 %v319, 0.0
    %vm323 = vcmask 31744
    %v325 = vsel %vm323, %v322, 0
    %v328 = vsel %vm323, %v126, 0
    %v331 = vsel %vm323, %v127, 0
    %v334 = vsel %vm323, %v128, 0
    %v337 = vsel %vm323, %v129, 0
    %v340 = vsel %vm323, %v130, 0
    %v343 = vsel %vm323, %v131, 0
    %v346 = vsel %vm323, %v132, 0
    %v349 = vsel %vm323, %v133, 0
    %351 = vmatprep.subr.mxu0 0.0
    %352 = vmatpush1.xpose.msra.mxu0 0.0
    %353 = vmatprep.subr.mxu0 0.0
    %354 = vmatpush1.xpose.msra.mxu0 0.0
    %355 = vmatprep.subr.mxu0 0.0
    %356 = vmatpush1.xpose.msra.mxu0 0.0
    %357 = vmatprep.subr.mxu0 0.0
    %358 = vmatpush1.xpose.msra.mxu0 0.0
    %359 = vmatprep.subr.mxu0 0.0
    %360 = vmatpush1.xpose.msra.mxu0 0.0
    %361 = vmatprep.subr.mxu0 0.0
    %362 = vmatpush1.xpose.msra.mxu0 0.0
    %363 = vmatprep.subr.mxu0 0.0
    %364 = vmatpush1.xpose.msra.mxu0 0.0
    %365 = vmatprep.subr.mxu0 0.0
    %366 = vmatpush1.xpose.msra.mxu0 0.0
    %367 = vmatprep.subr.mxu0 0.0
    %368 = vmatpush1.xpose.msra.mxu0 %v349
    %369 = vmatprep.subr.mxu0 0.0
    %370 = vmatpush1.xpose.msra.mxu0 %v346
    %371 = vmatprep.subr.mxu0 0.0
    %372 = vmatpush1.xpose.msra.mxu0 %v343
    %373 = vmatprep.subr.mxu0 0.0
    %374 = vmatpush1.xpose.msra.mxu0 %v340
    %375 = vmatprep.subr.mxu0 0.0
    %376 = vmatpush1.xpose.msra.mxu0 %v337
    %377 = vmatprep.subr.mxu0 0.0
    %378 = vmatpush1.xpose.msra.mxu0 %v334
    %379 = vmatprep.subr.mxu0 0.0
    %380 = vmatpush1.xpose.msra.mxu0 %v331
    %381 = vmatprep.subr.mxu0 0.0
    %382 = vmatpush1.xpose.msra.mxu0 %v328
    %383 = vmatprep.subr.mxu0 0.0
    %384 = vmatpush2.xpose.msra.mxu0 0.0
    %385 = vmatprep.subr.mxu0 0.0
    %386 = vmatpush2.xpose.msra.mxu0 0.0
    %387 = vmatprep.subr.mxu0 0.0
    %388 = vmatpush2.xpose.msra.mxu0 0.0
    %389 = vmatprep.subr.mxu0 0.0
    %390 = vmatpush2.xpose.msra.mxu0 0.0
    %391 = vmatprep.subr.mxu0 0.0
    %392 = vmatpush2.xpose.msra.mxu0 0.0
    %393 = vmatprep.subr.mxu0 0.0
    %394 = vmatpush2.xpose.msra.mxu0 0.0
    %395 = vmatprep.subr.mxu0 0.0
    %396 = vmatpush2.xpose.msra.mxu0 0.0
    %397 = vmatprep.subr.mxu0 0.0
    %398 = vmatpush2.xpose.msra.mxu0 0.0
    %399 = vmatprep.subr.mxu0 0.0
    %400 = vmatpush2.xpose.msra.mxu0 0.0
    %401 = vmatprep.subr.mxu0 0.0
    %402 = vmatpush2.xpose.msra.mxu0 0.0
    %403 = vmatprep.subr.mxu0 0.0
    %404 = vmatpush2.xpose.msra.mxu0 0.0
    %405 = vmatprep.subr.mxu0 0.0
    %406 = vmatpush2.xpose.msra.mxu0 0.0
    %407 = vmatprep.subr.mxu0 0.0
    %408 = vmatpush2.xpose.msra.mxu0 0.0
    %409 = vmatprep.subr.mxu0 0.0
    %410 = vmatpush2.xpose.msra.mxu0 0.0
    %411 = vmatprep.subr.mxu0 0.0
    %412 = vmatpush2.xpose.msra.mxu0 0.0
    %413 = vmatprep.subr.mxu0 0.0
    %414 = vmatpush2.xpose.msra.mxu0 0.0
    %415 = vmatprep.mubr.f32.mxu0 0.0
    %416 = vmatmul.mubr.f32.gmra.mxu0 %v325
    %v417 = vpop.f32.mrf.mxu0
    %v418 = vadd.f32 0.0, %v417
    %v419 = vpop.f32.mrf.mxu0
    %420 = vdwg.mxu0
    %v421 = vxor.u32 %v418, 2147483648
    %v422 = vmul.f32 %v421, 1.442695
    %v423 = vpow.pop %v422
    %v424 = vadd.f32 %v423, 1.0
    %v425 = vrcp.pop %v424
    %v426 = vmul.f32 1.0, %v425
    %v427 = vlaneseq
    %v428 = vshrl.u32 %v427, 7
    %v429 = vsub.s32 0, %v428
    %v430 = vrot.slane %v426, %v429
    %432 = vbcast.lane.b32.xlu0 %v430, 256
    %v433 = vpop.permute.xlu0 %432
    %s435 = sor.u32 256, 8
    %436 = vbcast.lane.b32.xlu0 %v430, %s435
    %v437 = vpop.permute.xlu0 %436
    %s439 = sor.u32 256, 16
    %440 = vbcast.lane.b32.xlu0 %v430, %s439
    %v441 = vpop.permute.xlu0 %440
    %s443 = sor.u32 256, 24
    %444 = vbcast.lane.b32.xlu0 %v430, %s443
    %v445 = vpop.permute.xlu0 %444
    %s447 = sor.u32 256, 32
    %448 = vbcast.lane.b32.xlu0 %v430, %s447
    %v449 = vpop.permute.xlu0 %448
    %s451 = sor.u32 256, 40
    %452 = vbcast.lane.b32.xlu0 %v430, %s451
    %v453 = vpop.permute.xlu0 %452
    %s455 = sor.u32 256, 48
    %456 = vbcast.lane.b32.xlu0 %v430, %s455
    %v457 = vpop.permute.xlu0 %456
    %s459 = sor.u32 256, 56
    %460 = vbcast.lane.b32.xlu0 %v430, %s459
    %v461 = vpop.permute.xlu0 %460
    %v462 = vlaneseq
    %v463 = vshrl.u32 %v462, 7
    %v464 = vsub.s32 1, %v463
    %v465 = vrot.slane %v426, %v464
    %467 = vbcast.lane.b32.xlu0 %v465, 256
    %v468 = vpop.permute.xlu0 %467
    %s470 = sor.u32 256, 8
    %471 = vbcast.lane.b32.xlu0 %v465, %s470
    %v472 = vpop.permute.xlu0 %471
    %s474 = sor.u32 256, 16
    %475 = vbcast.lane.b32.xlu0 %v465, %s474
    %v476 = vpop.permute.xlu0 %475
    %s478 = sor.u32 256, 24
    %479 = vbcast.lane.b32.xlu0 %v465, %s478
    %v480 = vpop.permute.xlu0 %479
    %s482 = sor.u32 256, 32
    %483 = vbcast.lane.b32.xlu0 %v465, %s482
    %v484 = vpop.permute.xlu0 %483
    %s486 = sor.u32 256, 40
    %487 = vbcast.lane.b32.xlu0 %v465, %s486
    %v488 = vpop.permute.xlu0 %487
    %s490 = sor.u32 256, 48
    %491 = vbcast.lane.b32.xlu0 %v465, %s490
    %v492 = vpop.permute.xlu0 %491
    %s494 = sor.u32 256, 56
    %495 = vbcast.lane.b32.xlu0 %v465, %s494
    %v496 = vpop.permute.xlu0 %495
    %v497 = vmul.f32 %v29, %v433
    %v498 = vmul.f32 %v30, %v433
    %v499 = vmul.f32 %v31, %v437
    %v500 = vmul.f32 %v32, %v437
    %v501 = vmul.f32 %v33, %v441
    %v502 = vmul.f32 %v34, %v441
    %v503 = vmul.f32 %v35, %v445
    %v504 = vmul.f32 %v36, %v445
    %v505 = vmul.f32 %v37, %v449
    %v506 = vmul.f32 %v38, %v449
    %v507 = vmul.f32 %v39, %v453
    %v508 = vmul.f32 %v40, %v453
    %v509 = vmul.f32 %v41, %v457
    %v510 = vmul.f32 %v42, %v457
    %v511 = vmul.f32 %v43, %v461
    %v512 = vmul.f32 %v44, %v461
    %v513 = vmul.f32 %v45, %v468
    %v514 = vmul.f32 %v46, %v468
    %v515 = vmul.f32 %v47, %v472
    %v516 = vmul.f32 %v48, %v472
    %v517 = vmul.f32 %v49, %v476
    %v518 = vmul.f32 %v50, %v476
    %v519 = vmul.f32 %v51, %v480
    %v520 = vmul.f32 %v52, %v480
    %v521 = vmul.f32 %v53, %v484
    %v522 = vmul.f32 %v54, %v484
    %v523 = vmul.f32 %v55, %v488
    %v524 = vmul.f32 %v56, %v488
    %v525 = vmul.f32 %v57, %v492
    %v526 = vmul.f32 %v58, %v492
    %v527 = vmul.f32 %v59, %v496
    %v528 = vmul.f32 %v60, %v496
    %529 = vst [vmem:[#allocation5] sm:$0xff] %v497
    %530 = vst [vmem:[#allocation5 + $0x8] sm:$0xff] %v498
    %531 = vst [vmem:[#allocation5 + $0x10] sm:$0xff] %v499
    %532 = vst [vmem:[#allocation5 + $0x18] sm:$0xff] %v500
    %533 = vst [vmem:[#allocation5 + $0x20] sm:$0xff] %v501
    %534 = vst [vmem:[#allocation5 + $0x28] sm:$0xff] %v502
    %535 = vst [vmem:[#allocation5 + $0x30] sm:$0xff] %v503
    %536 = vst [vmem:[#allocation5 + $0x38] sm:$0xff] %v504
    %537 = vst [vmem:[#allocation5 + $0x40] sm:$0xff] %v505
    %538 = vst [vmem:[#allocation5 + $0x48] sm:$0xff] %v506
    %539 = vst [vmem:[#allocation5 + $0x50] sm:$0xff] %v507
    %540 = vst [vmem:[#allocation5 + $0x58] sm:$0xff] %v508
    %541 = vst [vmem:[#allocation5 + $0x60] sm:$0xff] %v509
    %542 = vst [vmem:[#allocation5 + $0x68] sm:$0xff] %v510
    %543 = vst [vmem:[#allocation5 + $0x70] sm:$0xff] %v511
    %544 = vst [vmem:[#allocation5 + $0x78] sm:$0xff] %v512
    %545 = vst [vmem:[#allocation5 + $0x80] sm:$0xff] %v513
    %546 = vst [vmem:[#allocation5 + $0x88] sm:$0xff] %v514
    %547 = vst [vmem:[#allocation5 + $0x90] sm:$0xff] %v515
    %548 = vst [vmem:[#allocation5 + $0x98] sm:$0xff] %v516
    %549 = vst [vmem:[#allocation5 + $0xa0] sm:$0xff] %v517
    %550 = vst [vmem:[#allocation5 + $0xa8] sm:$0xff] %v518
    %551 = vst [vmem:[#allocation5 + $0xb0] sm:$0xff] %v519
    %552 = vst [vmem:[#allocation5 + $0xb8] sm:$0xff] %v520
    %553 = vst [vmem:[#allocation5 + $0xc0] sm:$0xff] %v521
    %554 = vst [vmem:[#allocation5 + $0xc8] sm:$0xff] %v522
    %555 = vst [vmem:[#allocation5 + $0xd0] sm:$0xff] %v523
    %556 = vst [vmem:[#allocation5 + $0xd8] sm:$0xff] %v524
    %557 = vst [vmem:[#allocation5 + $0xe0] sm:$0xff] %v525
    %558 = vst [vmem:[#allocation5 + $0xe8] sm:$0xff] %v526
    %559 = vst [vmem:[#allocation5 + $0xf0] sm:$0xff] %v527
    %560 = vst [vmem:[#allocation5 + $0xf8] sm:$0xff] %v528
    // Predicated region
    $region18: #{tpu_custom_call.1} parent=1 // pred_check
      _
    $region19: #{tpu_custom_call.1} parent=1 // pred_check_branch
      %562 = sbr.rel (0) target = $region21
    $region20: #{tpu_custom_call.1} parent=1 // pred_region
      %s564 = ssub.s32 4096, 4096
      %565 = vsyncadd [#allocation4], %s564
      %s566 = sshll.u32 [#allocation5], 4
      %s567 = int_to_ptr.vmem [resolvable:$true] %s566
      %572 = dma.vmem_to_hbm [thread:$0]  %s567, 4096, %s3, [#allocation4], 256, 256, 16
    $region21: #{tpu_custom_call.1} parent=1 // pred_fallthru
      _
    // Predicated region
    $region22: #{tpu_custom_call.1} parent=1 // pred_check
      _
    $region23: #{tpu_custom_call.1} parent=1 // pred_check_branch
      %574 = sbr.rel (0) target = $region25
    $region24: #{tpu_custom_call.1} parent=1 // pred_region
      %575 = dma.done [#allocation4], 4096
    $region25: #{tpu_custom_call.1} parent=1 // pred_fallthru
      _
    %576 = vsyncpa [#allocation3], 1
    %577 = vsyncpa [#allocation4], 1

</llo_original>
